<compile_context>
chip_gen: v7x
topology: tpu7x:2x2x1
jax: 0.10.0
libtpu: 0.0.40
codegen_flags: <defaults>
</compile_context>

<pallas_src>
import jax
import jax.numpy as jnp
from jax.experimental import pallas as pl
from jax.experimental.pallas import tpu as pltpu


def _dropout2d_kernel(mask_ref, x_ref, o_ref):
    # mask_ref: (tile_rows, 1) f32, already scaled by 1/(1-p).
    # x_ref/o_ref: (tile_rows, tile_hw) in x.dtype.
    # Product is computed in f32 (jnp promotion) and cast once on store, so
    # low-precision dtypes never see a rounded 1/(1-p) scale.
    o_ref[...] = (x_ref[...] * mask_ref[...]).astype(o_ref.dtype)


def _round_up(a, b):
    return (a + b - 1) // b * b


def _block_budget_bytes():
    # Per-block VMEM budget; the pipeline holds ~4x this (double-buffered
    # input + output).  v7x HBM is ~2.3x faster than v6e, so use bigger tiles
    # there to re-amortize the fixed ~0.35us per-grid-step overhead.
    try:
        kind = jax.devices()[0].device_kind.lower()
    except Exception:
        kind = ""
    if "v7" in kind:
        return 6 * 1024 * 1024
    return 4 * 1024 * 1024  # v5e / v6e / default


def robust_dropout2d(x, p=0.5, seed=0, training=True, inplace=False):
    """Pallas implementation of Robust_Dropout2d.forward (NCHW input)."""
    if p < 0.0 or p > 1.0:
        raise ValueError(
            f"Dropout probability has to be between 0 and 1, but got {p}")
    if not training:
        return x
    if x.ndim != 4:
        raise ValueError(
            f"Expected 4D input (got {x.ndim}D input). Input shape: {x.shape}")
    if p == 0.0:
        return x
    if p == 1.0:
        # PyTorch's literal expression gives 0/0 = NaN here; Dropout2d
        # semantics are "drop everything", so return zeros.
        return jnp.zeros_like(x)

    N, C, H, W = x.shape
    NC, HW = N * C, H * W
    keep_prob = 1.0 - p
    itemsize = jnp.dtype(x.dtype).itemsize
    # Packed sublane tile: 8 for 32-bit, 16 for bf16/fp16, 32 for 8-bit.
    sub = {4: 8, 2: 16, 1: 32}.get(itemsize, 8)

    block_budget = _block_budget_bytes()

    # ---- lane/sublane-aligned, VMEM-budgeted tile selection ----------------
    # HW tile: largest multiple of 128 such that a `sub`-row block fits.
    max_hw = max(128, (block_budget // (sub * itemsize)) // 128 * 128)
    tile_hw = min(_round_up(HW, 128), max_hw)
    # Row tile: largest multiple of `sub` keeping tile_rows*tile_hw in budget.
    max_rows = max(sub, (block_budget // (tile_hw * itemsize)) // sub * sub)
    tile_rows = min(_round_up(NC, sub), max_rows)

    # v7x has two TensorCores: make sure a non-trivial tensor yields >= 2 grid
    # steps along a "parallel" axis (one extra step is noise on v5e/v6e).
    if NC * HW * itemsize > 2 * 1024 * 1024:
        if pl.cdiv(NC, tile_rows) * pl.cdiv(HW, tile_hw) < 2:
            if NC > sub:
                tile_rows = _round_up(pl.cdiv(NC, 2), sub)
            elif HW > 256:
                tile_hw = _round_up(pl.cdiv(HW, 2), 128)

    grid = (pl.cdiv(NC, tile_rows), pl.cdiv(HW, tile_hw))

    # ---- per-channel keep mask, f32, pre-scaled by 1/(1-p) -----------------
    key = jax.random.PRNGKey(seed)
    keep = jax.random.bernoulli(key, keep_prob, (NC,))
    mask = keep.astype(jnp.float32) * (1.0 / keep_prob)
    nc_mask = grid[0] * tile_rows              # pad only the tiny mask
    mask = jnp.pad(mask, (0, nc_mask - NC)).reshape(nc_mask, 1)

    x2 = x.reshape(NC, HW)                     # free reshape; no padding

    out2 = pl.pallas_call(
        _dropout2d_kernel,
        out_shape=jax.ShapeDtypeStruct((NC, HW), x.dtype),
        grid=grid,
        in_specs=[
            # Mask block depends only on the row block; with the HW axis
            # innermost its block index is constant across consecutive grid
            # steps, so it is not re-DMA'd every step.
            pl.BlockSpec((tile_rows, 1), lambda i, j: (i, 0)),
            pl.BlockSpec((tile_rows, tile_hw), lambda i, j: (i, j)),
        ],
        out_specs=pl.BlockSpec((tile_rows, tile_hw), lambda i, j: (i, j)),
        compiler_params=pltpu.CompilerParams(
            dimension_semantics=("parallel", "parallel"),
            vmem_limit_bytes=48 * 1024 * 1024),
        # In-place write-back (halves HBM allocation; traffic is unchanged).
        input_output_aliases=({1: 0} if inplace else {}),
    )(mask, x2)

    return out2.reshape(N, C, H, W)


if __name__ == "__main__":
    key = jax.random.PRNGKey(0)
    x = jax.random.normal(key, (2, 4, 16, 16), dtype=jnp.float32)

    p = 0.5
    out = jax.block_until_ready(robust_dropout2d(x, p=p, seed=1234, training=True))

    # Sanity: every (n, c) plane is either all-zero or exactly x/(1-p).
    x_np = jax.device_get(x)
    o_np = jax.device_get(out)
    scale = 1.0 / (1.0 - p)
    for n in range(x_np.shape[0]):
        for c in range(x_np.shape[1]):
            plane = o_np[n, c]
            kept = x_np[n, c] * scale
            is_zero = bool(abs(plane).max() == 0.0)
            is_kept = bool(abs(plane - kept).max() < 1e-5)
            assert is_zero or is_kept, f"channel ({n},{c}) mask not per-channel"

    # Ragged shape (NC % 8 != 0, HW % 128 != 0): exercises the pad-free
    # cdiv-grid boundary-masking path.
    x_r = jax.random.normal(jax.random.PRNGKey(1), (1, 3, 7, 7), dtype=jnp.float32)
    out_r = jax.block_until_ready(robust_dropout2d(x_r, p=0.3, seed=7, training=True))
    assert out_r.shape == x_r.shape
    xr_np = jax.device_get(x_r)
    or_np = jax.device_get(out_r)
    s_r = 1.0 / 0.7
    for c in range(3):
        plane = or_np[0, c]
        kept = xr_np[0, c] * s_r
        assert bool(abs(plane).max() == 0.0) or bool(abs(plane - kept).max() < 1e-4)

    # bf16 input: exercises the packed (16-row) sublane tile and the f32-mask
    # math (no rounded scale factor baked into a bf16 mask).
    x_b = jax.random.normal(jax.random.PRNGKey(2), (2, 4, 16, 16), dtype=jnp.bfloat16)
    out_b = jax.block_until_ready(robust_dropout2d(x_b, p=p, seed=11, training=True))
    assert out_b.shape == x_b.shape and out_b.dtype == x_b.dtype
    xb32 = jax.device_get(x_b.astype(jnp.float32))
    ob32 = jax.device_get(out_b.astype(jnp.float32))
    for n in range(2):
        for c in range(4):
            plane = ob32[n, c]
            kept = xb32[n, c] * scale
            is_zero = bool(abs(plane).max() == 0.0)
            is_kept = bool(abs(plane - kept).max() < 0.1)
            assert is_zero or is_kept, f"bf16 channel ({n},{c}) mask not per-channel"

    # Eval mode passes input through unchanged; p=1 drops everything (no
    # NaNs); p=0 is the identity.
    out_eval = jax.block_until_ready(robust_dropout2d(x, p=p, training=False))
    assert bool(jnp.array_equal(out_eval, x))
    out_p1 = jax.block_until_ready(robust_dropout2d(x, p=1.0, seed=3, training=True))
    assert float(jnp.abs(out_p1).max()) == 0.0
    out_p0 = jax.block_until_ready(robust_dropout2d(x, p=0.0, seed=3, training=True))
    assert bool(jnp.array_equal(out_p0, x))

    print("KERNEL_OK")
</pallas_src>

<mosaic_0001>
module attributes {stable_mosaic.version = 11 : i64} {
  func.func @_dropout2d_kernel(%arg0: i32, %arg1: i32, %arg2: memref<8x1xf32, #tpu.memory_space<vmem>>, %arg3: memref<8x256xf32, #tpu.memory_space<vmem>>, %arg4: memref<8x256xf32, #tpu.memory_space<vmem>>) attributes {dimension_semantics = [#tpu.dimension_semantics<parallel>, #tpu.dimension_semantics<parallel>], iteration_bounds = array<i64: 1, 1>, scalar_prefetch = 0 : i64, scratch_operands = 0 : i64, tpu.core_type = #tpu.core_type<tc>, window_params = [{transform_indices = @transform_0, window_bounds = array<i64: 8, 1>}, {transform_indices = @transform_1, window_bounds = array<i64: 8, 256>}, {transform_indices = @transform_2, window_bounds = array<i64: 8, 256>}]} {
    %c0 = arith.constant 0 : index
    %c0_0 = arith.constant 0 : index
    %0 = vector.load %arg3[%c0, %c0_0] : memref<8x256xf32, #tpu.memory_space<vmem>>, vector<8x256xf32>
    %c0_1 = arith.constant 0 : index
    %c0_2 = arith.constant 0 : index
    %1 = vector.load %arg2[%c0_1, %c0_2] : memref<8x1xf32, #tpu.memory_space<vmem>>, vector<8x1xf32>
    %2 = vector.broadcast %1 : vector<8x1xf32> to vector<8x256xf32>
    %3 = arith.mulf %0, %2 : vector<8x256xf32>
    %c0_3 = arith.constant 0 : index
    %c0_4 = arith.constant 0 : index
    %4 = vector.load %arg4[%c0_3, %c0_4] : memref<8x256xf32, #tpu.memory_space<vmem>>, vector<8x256xf32>
    tpu.vector_store %arg4[%c0_3, %c0_4], %3 {strides = array<i32>} : memref<8x256xf32, #tpu.memory_space<vmem>>, vector<8x256xf32>,
    return
  }
  func.func @transform_0(%arg0: i32, %arg1: i32) -> (i32, i32) {
    %c0_i32 = arith.constant 0 : i32
    %c0_i32_0 = arith.constant 0 : i32
    return %arg0, %c0_i32 : i32, i32
  }
  func.func @transform_1(%arg0: i32, %arg1: i32) -> (i32, i32) {
    %c0_i32 = arith.constant 0 : i32
    return %arg0, %arg1 : i32, i32
  }
  func.func @transform_2(%arg0: i32, %arg1: i32) -> (i32, i32) {
    %c0_i32 = arith.constant 0 : i32
    return %arg0, %arg1 : i32, i32
  }
}

</mosaic_0001>

<llo_original>
// kernel: tpu_custom_call.1
$region0: #{tpu_custom_call.1}
  #allocation0 [shape = 'u32[]', space=smem, size = 0x4, offset = 0x4, fixed_abs, tag = 'smem constant byte address 0x4 - core index']
  #allocation1 [shape = 'u32[144,128]{1,0:T(1,128)}', space=vmem, size = 0x12000, scoped, tag = 'internal scratch']
  %s0 = inlined_call_operand.vmem [shape: f32[8,1], index: 0, kind: input, shape index: {}]
  %s1 = inlined_call_operand.hbm [shape: f32[8,256], index: 1, kind: input, shape index: {}]
  %s2 = inlined_call_operand.hbm [shape: f32[8,256], index: 2, kind: output, shape index: {}]
  %s3 = sld [smem:[#allocation0]]
  $region22: #{tpu_custom_call.1} parent=0
    _
  %s5 = ssub.s32 1, %s3
  %s6 = scalar_select 0, %s5, %s3
  $region1: #{tpu_custom_call.1} parent=0
    #allocation2 [shape = 'u8[8192]{0}', space=vmem, size = 0x2000, scoped, tag = 'input window, operand 1, single buffered']
    #allocation3 [shape = 's32[1]{0}', space=sflag, size = 0x4, scoped, tag = 'scoped memory for tpu_custom_call.1']
    #allocation4 [shape = 's32[1]{0}', space=sflag, size = 0x4, scoped, tag = 'scoped memory for tpu_custom_call.1']
    #allocation5 [shape = 'u8[8192]{0}', space=vmem, size = 0x2000, scoped, tag = 'output window, operand 0, single buffered']
    %7 = vsyncpa [#allocation3], 0
    %8 = vsyncpa [#allocation4], 0
    // Predicated region
    $region2: #{tpu_custom_call.1} parent=1 // pred_check
      _
    $region3: #{tpu_custom_call.1} parent=1 // pred_check_branch
      %10 = sbr.rel (0) target = $region5
    $region4: #{tpu_custom_call.1} parent=1 // pred_region
      _
    $region5: #{tpu_custom_call.1} parent=1 // pred_fallthru
      _
    // Predicated region
    $region6: #{tpu_custom_call.1} parent=1 // pred_check
      _
    $region7: #{tpu_custom_call.1} parent=1 // pred_check_branch
      %12 = sbr.rel (0) target = $region9
    $region8: #{tpu_custom_call.1} parent=1 // pred_region
      %s14 = ssub.s32 256, 256
      %15 = vsyncadd [#allocation3], %s14
      %s17 = sshll.u32 [#allocation2], 4
      %s18 = int_to_ptr.vmem [resolvable:$true] %s17
      %20 = dma.hbm_to_vmem [thread:$0]  %s1, 256, %s18, [#allocation3]
    $region9: #{tpu_custom_call.1} parent=1 // pred_fallthru
      _
    // Predicated region
    $region10: #{tpu_custom_call.1} parent=1 // pred_check
      _
    $region11: #{tpu_custom_call.1} parent=1 // pred_check_branch
      %22 = sbr.rel (0) target = $region13
    $region12: #{tpu_custom_call.1} parent=1 // pred_region
      %23 = dma.done [#allocation3], 256
    $region13: #{tpu_custom_call.1} parent=1 // pred_fallthru
      _
    %v24 = vld [vmem:[#allocation2] sm:$0xff]
    %v25 = vld [vmem:[#allocation2 + $0x8] sm:$0xff]
    %v26 = vld [vmem:[%s0] sm:$0xff]
    %28 = vset.pattern.permute.xlu0 0
    %29 = vperm.xlu0 %28, %v26
    %v30 = vpop.permute.xlu0 %29
    %v32 = vmul.f32 %v24, %v30
    %v33 = vmul.f32 %v25, %v30
    %34 = vst [vmem:[#allocation5] sm:$0xff] %v32
    %35 = vst [vmem:[#allocation5 + $0x8] sm:$0xff] %v33
    // Predicated region
    $region14: #{tpu_custom_call.1} parent=1 // pred_check
      _
    $region15: #{tpu_custom_call.1} parent=1 // pred_check_branch
      %37 = sbr.rel (0) target = $region17
    $region16: #{tpu_custom_call.1} parent=1 // pred_region
      %s39 = ssub.s32 256, 256
      %40 = vsyncadd [#allocation4], %s39
      %s42 = sshll.u32 [#allocation5], 4
      %s43 = int_to_ptr.vmem [resolvable:$true] %s42
      %45 = dma.vmem_to_hbm [thread:$0]  %s43, 256, %s2, [#allocation4]
    $region17: #{tpu_custom_call.1} parent=1 // pred_fallthru
      _
    // Predicated region
    $region18: #{tpu_custom_call.1} parent=1 // pred_check
      _
    $region19: #{tpu_custom_call.1} parent=1 // pred_check_branch
      %47 = sbr.rel (0) target = $region21
    $region20: #{tpu_custom_call.1} parent=1 // pred_region
      %48 = dma.done [#allocation4], 256
    $region21: #{tpu_custom_call.1} parent=1 // pred_fallthru
      _
    %49 = vsyncpa [#allocation3], 1
    %50 = vsyncpa [#allocation4], 1

</llo_original>
